<compile_context>
chip_gen: v7x
topology: tpu7x:2x2x1
jax: 0.10.0
libtpu: 0.0.40
codegen_flags: <defaults>
</compile_context>

<pallas_src>
import functools

import jax
import jax.numpy as jnp
from jax.experimental import pallas as pl
from jax.experimental.pallas import tpu as pltpu

LANES = 128  # fused head width / lane-dense output slab width


def _softplus(x):
    # numerically stable softplus = max(x, 0) + log1p(exp(-|x|))
    return jnp.maximum(x, 0.0) + jnp.log1p(jnp.exp(-jnp.abs(x)))


def _round_up(n, m):
    return ((n + m - 1) // m) * m


def actor_critic_kernel(
    stats_ref,          # SMEM (2,): [mean, 1/(std + 1e-8)]
    state_ref,          # (tb, state_dim) f32 batch tile
    w1_ref, b1_ref,     # trunk layer 1: state_dim -> 256   (bf16 / f32 bias)
    w2_ref, b2_ref,     # trunk layer 2: 256 -> 128
    wh_ref, bh_ref,     # fused head layer 1: 128 -> 128 (actor 0:64 | critic 64:128)
    wo_ref, bo_ref,     # fused head layer 2: 128 -> 128 (block-diag, lane-padded)
    out_ref,            # (tb, 128) bf16 lane-dense output slab
    *, action_dim,
):
    mu = stats_ref[0]
    inv_std = stats_ref[1]

    # global normalization (stats precomputed over the whole batch), bf16 for MXU
    xn = ((state_ref[...] - mu) * inv_std).astype(jnp.bfloat16)

    # shared feature trunk
    h1 = jnp.dot(xn, w1_ref[...], preferred_element_type=jnp.float32) + b1_ref[...]
    h1 = jnp.maximum(h1, 0.0).astype(jnp.bfloat16)
    feat = jnp.dot(h1, w2_ref[...], preferred_element_type=jnp.float32) + b2_ref[...]
    feat = jnp.maximum(feat, 0.0).astype(jnp.bfloat16)

    # fused actor/critic hidden layer: one 128x128 MXU push
    h = jnp.dot(feat, wh_ref[...], preferred_element_type=jnp.float32) + bh_ref[...]
    h = jnp.maximum(h, 0.0).astype(jnp.bfloat16)

    # fused output layer -> lane-dense slab:
    #   lanes [0:action_dim]       actor pre-activation (softplus below)
    #   lane  action_dim           critic value (identity)
    #   lanes [action_dim+1:128]   exactly zero (zero weights & bias, identity)
    z = jnp.dot(h, wo_ref[...], preferred_element_type=jnp.float32) + bo_ref[...]
    lane = jax.lax.broadcasted_iota(jnp.int32, z.shape, 1)
    out_ref[...] = jnp.where(lane < action_dim, _softplus(z), z).astype(out_ref.dtype)


def _pack_params(params):
    """Pre-pack / pre-cast weights for the fused kernel (bf16 MXU operands)."""
    action_dim = params["wa2"].shape[1]

    w1 = params["w1"].astype(jnp.bfloat16)
    b1 = params["b1"].astype(jnp.float32)
    w2 = params["w2"].astype(jnp.bfloat16)
    b2 = params["b2"].astype(jnp.float32)

    # heads, layer 1: concat along output lanes -> (128, 128)
    wh = jnp.concatenate([params["wa1"], params["wc1"]], axis=1).astype(jnp.bfloat16)
    bh = jnp.concatenate([params["ba1"], params["bc1"]], axis=1).astype(jnp.float32)

    # heads, layer 2: block-diagonal, padded to 128 output lanes
    wo = jnp.zeros((LANES, LANES), jnp.float32)
    wo = wo.at[:64, :action_dim].set(params["wa2"])
    wo = wo.at[64:, action_dim].set(params["wc2"][:, 0])
    bo = jnp.zeros((1, LANES), jnp.float32)
    bo = bo.at[0, :action_dim].set(params["ba2"][0])
    bo = bo.at[0, action_dim].set(params["bc2"][0, 0])

    return w1, b1, w2, b2, wh, bh, wo.astype(jnp.bfloat16), bo


def actor_critic_forward(state, params, *, block_b=1024):
    """state: (B, state_dim) f32.  Returns (action_mean, action_std, value)."""
    B, state_dim = state.shape
    action_dim = params["wa2"].shape[1]
    assert action_dim + 1 <= LANES

    # Global normalization stats (torch: state.mean()/state.std() over ALL
    # elements, std unbiased / ddof=1).  Computed once here (tiny reduce) and
    # passed as SMEM scalars so batch tiling stays exact.
    mu = jnp.mean(state)
    if state.size > 1:
        std = jnp.sqrt(jnp.var(state, ddof=1))
    else:
        std = jnp.float32(0.0)  # guard: torch.std of a single element is NaN
    stats = jnp.stack([mu, 1.0 / (std + 1e-8)]).astype(jnp.float32)

    # Padding-aware, sublane-aligned batch tiling.  Keep >= 2 grid steps when
    # the batch allows it so v7x's two TensorCores both get work.
    n_tiles = max(1, pl.cdiv(B, block_b))
    if B >= 16:
        n_tiles = max(n_tiles, 2)
    tb = _round_up(pl.cdiv(B, n_tiles), 8)
    b_pad = _round_up(B, tb)
    state_p = state if b_pad == B else jnp.pad(state, ((0, b_pad - B), (0, 0)))

    w1, b1, w2, b2, wh, bh, wo, bo = _pack_params(params)
    weights = (w1, b1, w2, b2, wh, bh, wo, bo)

    def const_spec(a):  # whole array, VMEM-resident, never re-fetched -> 1 buffer
        nd = a.ndim
        return pl.BlockSpec(a.shape, lambda i, _nd=nd: (0,) * _nd,
                            pipeline_mode=pl.Buffered(1))

    # Explicit VMEM budget: double-buffered lane-padded input (tb x 128 f32),
    # double-buffered bf16 output slab, single-buffered weights, plus headroom
    # for compiler-managed f32/bf16 intermediates (h1 is tb x 256 f32).
    weight_bytes = sum(int(a.size) * a.dtype.itemsize for a in weights)
    io_bytes = 2 * tb * 128 * 4 + 2 * tb * LANES * 2
    scratch_bytes = 8 * tb * 256 * 4
    vmem_limit = int(min(max(weight_bytes + io_bytes + scratch_bytes, 8 << 20),
                         48 << 20))

    slab = pl.pallas_call(
        functools.partial(actor_critic_kernel, action_dim=action_dim),
        out_shape=jax.ShapeDtypeStruct((b_pad, LANES), jnp.bfloat16),
        grid=(b_pad // tb,),
        in_specs=[
            pl.BlockSpec(memory_space=pltpu.MemorySpace.SMEM),   # stats scalars
            pl.BlockSpec((tb, state_dim), lambda i: (i, 0)),     # state batch tile
            const_spec(w1), const_spec(b1),
            const_spec(w2), const_spec(b2),
            const_spec(wh), const_spec(bh),
            const_spec(wo), const_spec(bo),
        ],
        out_specs=pl.BlockSpec((tb, LANES), lambda i: (i, 0)),
        compiler_params=pltpu.CompilerParams(
            dimension_semantics=("parallel",),
            vmem_limit_bytes=vmem_limit,
        ),
    )(stats, state_p, *weights)

    action_mean = slab[:B, :action_dim].astype(jnp.float32)
    value = slab[:B, action_dim:action_dim + 1].astype(jnp.float32)
    # action_std = clamp(exp(actor_log_std), 1e-3, 1.0) -- tiny elementwise glue
    action_std = jnp.clip(jnp.exp(params["actor_log_std"]), 0.001, 1.0)
    return action_mean, action_std, value


def init_params(key, state_dim, action_dim):
    """Deterministic synthetic init (PyTorch-style uniform +-1/sqrt(fan_in))."""
    def linear(k, fan_in, fan_out):
        kw, kb = jax.random.split(k)
        bound = 1.0 / jnp.sqrt(fan_in)
        w = jax.random.uniform(kw, (fan_in, fan_out), jnp.float32, -bound, bound)
        b = jax.random.uniform(kb, (1, fan_out), jnp.float32, -bound, bound)
        return w, b

    keys = jax.random.split(key, 6)
    w1, b1 = linear(keys[0], state_dim, 256)
    w2, b2 = linear(keys[1], 256, 128)
    wa1, ba1 = linear(keys[2], 128, 64)
    wa2, ba2 = linear(keys[3], 64, action_dim)
    wc1, bc1 = linear(keys[4], 128, 64)
    wc2, bc2 = linear(keys[5], 64, 1)
    return {
        "w1": w1, "b1": b1, "w2": w2, "b2": b2,
        "wa1": wa1, "ba1": ba1, "wa2": wa2, "ba2": ba2,
        "wc1": wc1, "bc1": bc1, "wc2": wc2, "bc2": bc2,
        "actor_log_std": jnp.zeros((action_dim,), jnp.float32),
    }


def reference_forward(state, params):
    """Pure-JAX f32 reference matching the PyTorch module."""
    x = (state - jnp.mean(state)) / (jnp.sqrt(jnp.var(state, ddof=1)) + 1e-8)
    h1 = jnp.maximum(x @ params["w1"] + params["b1"], 0.0)
    feat = jnp.maximum(h1 @ params["w2"] + params["b2"], 0.0)
    a1 = jnp.maximum(feat @ params["wa1"] + params["ba1"], 0.0)
    action_mean = jax.nn.softplus(a1 @ params["wa2"] + params["ba2"])
    c1 = jnp.maximum(feat @ params["wc1"] + params["bc1"], 0.0)
    value = c1 @ params["wc2"] + params["bc2"]
    action_std = jnp.clip(jnp.exp(params["actor_log_std"]), 0.001, 1.0)
    return action_mean, action_std, value


if __name__ == "__main__":
    state_dim = 12   # e.g. quadrotor state
    action_dim = 4   # rotor speeds

    key = jax.random.PRNGKey(0)
    k_params, k_state = jax.random.split(key)
    params = init_params(k_params, state_dim, action_dim)

    # batch=8: single small tile; batch=10: sublane-padding path;
    # batch=300: multi-step grid + padding-aware tb selection.
    for batch in (8, 10, 300):
        state = jax.random.normal(jax.random.fold_in(k_state, batch),
                                  (batch, state_dim), jnp.float32)
        action_mean, action_std, value = actor_critic_forward(state, params)
        jax.block_until_ready((action_mean, action_std, value))

        assert action_mean.shape == (batch, action_dim)
        assert action_std.shape == (action_dim,)
        assert value.shape == (batch, 1)
        assert bool(jnp.all(action_mean >= 0.0))        # softplus output
        assert bool(jnp.all(jnp.isfinite(value)))

        am_ref, std_ref, v_ref = reference_forward(state, params)
        assert bool(jnp.allclose(action_mean, am_ref, atol=5e-2, rtol=5e-2))
        assert bool(jnp.allclose(value, v_ref, atol=5e-2, rtol=5e-2))
        assert bool(jnp.allclose(action_std, std_ref))

    print("KERNEL_OK")
</pallas_src>

<mosaic_0001>
module attributes {stable_mosaic.version = 11 : i64} {
  func.func @actor_critic_kernel(%arg0: i32, %arg1: memref<2xf32, #tpu.memory_space<smem>>, %arg2: memref<8x12xf32, #tpu.memory_space<vmem>>, %arg3: memref<12x256xbf16, #tpu.memory_space<vmem>>, %arg4: memref<1x256xf32, #tpu.memory_space<vmem>>, %arg5: memref<256x128xbf16, #tpu.memory_space<vmem>>, %arg6: memref<1x128xf32, #tpu.memory_space<vmem>>, %arg7: memref<128x128xbf16, #tpu.memory_space<vmem>>, %arg8: memref<1x128xf32, #tpu.memory_space<vmem>>, %arg9: memref<128x128xbf16, #tpu.memory_space<vmem>>, %arg10: memref<1x128xf32, #tpu.memory_space<vmem>>, %arg11: memref<8x128xbf16, #tpu.memory_space<vmem>>) attributes {dimension_semantics = [#tpu.dimension_semantics<parallel>], iteration_bounds = array<i64: 1>, scalar_prefetch = 0 : i64, scratch_operands = 0 : i64, tpu.core_type = #tpu.core_type<tc>, window_params = [{transform_indices = @transform_0, window_bounds = array<i64: 2>}, {transform_indices = @transform_1, window_bounds = array<i64: 8, 12>}, {pipeline_mode = #tpu.pipeline_mode<synchronous>, transform_indices = @transform_2, window_bounds = array<i64: 12, 256>}, {pipeline_mode = #tpu.pipeline_mode<synchronous>, transform_indices = @transform_3, window_bounds = array<i64: 1, 256>}, {pipeline_mode = #tpu.pipeline_mode<synchronous>, transform_indices = @transform_4, window_bounds = array<i64: 256, 128>}, {pipeline_mode = #tpu.pipeline_mode<synchronous>, transform_indices = @transform_5, window_bounds = array<i64: 1, 128>}, {pipeline_mode = #tpu.pipeline_mode<synchronous>, transform_indices = @transform_6, window_bounds = array<i64: 128, 128>}, {pipeline_mode = #tpu.pipeline_mode<synchronous>, transform_indices = @transform_7, window_bounds = array<i64: 1, 128>}, {pipeline_mode = #tpu.pipeline_mode<synchronous>, transform_indices = @transform_8, window_bounds = array<i64: 128, 128>}, {pipeline_mode = #tpu.pipeline_mode<synchronous>, transform_indices = @transform_9, window_bounds = array<i64: 1, 128>}, {transform_indices = @transform_10, window_bounds = array<i64: 8, 128>}]} {
    %c0 = arith.constant 0 : index
    %0 = memref.load %arg1[%c0] : memref<2xf32, #tpu.memory_space<smem>>
    %c1 = arith.constant 1 : index
    %1 = memref.load %arg1[%c1] : memref<2xf32, #tpu.memory_space<smem>>
    %c0_0 = arith.constant 0 : index
    %c0_1 = arith.constant 0 : index
    %2 = vector.load %arg2[%c0_0, %c0_1] : memref<8x12xf32, #tpu.memory_space<vmem>>, vector<8x12xf32>
    %3 = vector.broadcast %0 : f32 to vector<8x12xf32>
    %4 = arith.subf %2, %3 : vector<8x12xf32>
    %5 = vector.broadcast %1 : f32 to vector<8x12xf32>
    %6 = arith.mulf %4, %5 : vector<8x12xf32>
    %7 = arith.truncf %6 : vector<8x12xf32> to vector<8x12xbf16>
    %c0_2 = arith.constant 0 : index
    %c0_3 = arith.constant 0 : index
    %8 = vector.load %arg3[%c0_2, %c0_3] : memref<12x256xbf16, #tpu.memory_space<vmem>>, vector<12x256xbf16>
    %cst = arith.constant dense<0.000000e+00> : vector<8x256xf32>
    %9 = tpu.matmul %7, %8, %cst {dimension_numbers = #tpu.dot_dimension_numbers<[1], [0], [0], [1], [0, 0, 1, 1], [], []>} : vector<8x12xbf16>, vector<12x256xbf16>, vector<8x256xf32> -> vector<8x256xf32>
    %c0_4 = arith.constant 0 : index
    %c0_5 = arith.constant 0 : index
    %10 = vector.load %arg4[%c0_4, %c0_5] : memref<1x256xf32, #tpu.memory_space<vmem>>, vector<1x256xf32>
    %11 = vector.broadcast %10 : vector<1x256xf32> to vector<8x256xf32>
    %12 = arith.addf %9, %11 : vector<8x256xf32>
    %cst_6 = arith.constant 0.000000e+00 : f32
    %13 = vector.broadcast %cst_6 : f32 to vector<8x256xf32>
    %14 = arith.maximumf %12, %13 : vector<8x256xf32>
    %15 = arith.truncf %14 : vector<8x256xf32> to vector<8x256xbf16>
    %c0_7 = arith.constant 0 : index
    %c0_8 = arith.constant 0 : index
    %16 = vector.load %arg5[%c0_7, %c0_8] : memref<256x128xbf16, #tpu.memory_space<vmem>>, vector<256x128xbf16>
    %cst_9 = arith.constant dense<0.000000e+00> : vector<8x128xf32>
    %17 = tpu.matmul %15, %16, %cst_9 {dimension_numbers = #tpu.dot_dimension_numbers<[1], [0], [0], [1], [0, 0, 1, 1], [], []>} : vector<8x256xbf16>, vector<256x128xbf16>, vector<8x128xf32> -> vector<8x128xf32>
    %c0_10 = arith.constant 0 : index
    %c0_11 = arith.constant 0 : index
    %18 = vector.load %arg6[%c0_10, %c0_11] : memref<1x128xf32, #tpu.memory_space<vmem>>, vector<1x128xf32>
    %19 = vector.broadcast %18 : vector<1x128xf32> to vector<8x128xf32>
    %20 = arith.addf %17, %19 : vector<8x128xf32>
    %cst_12 = arith.constant 0.000000e+00 : f32
    %21 = vector.broadcast %cst_12 : f32 to vector<8x128xf32>
    %22 = arith.maximumf %20, %21 : vector<8x128xf32>
    %23 = arith.truncf %22 : vector<8x128xf32> to vector<8x128xbf16>
    %c0_13 = arith.constant 0 : index
    %c0_14 = arith.constant 0 : index
    %24 = vector.load %arg7[%c0_13, %c0_14] : memref<128x128xbf16, #tpu.memory_space<vmem>>, vector<128x128xbf16>
    %cst_15 = arith.constant dense<0.000000e+00> : vector<8x128xf32>
    %25 = tpu.matmul %23, %24, %cst_15 {dimension_numbers = #tpu.dot_dimension_numbers<[1], [0], [0], [1], [0, 0, 1, 1], [], []>} : vector<8x128xbf16>, vector<128x128xbf16>, vector<8x128xf32> -> vector<8x128xf32>
    %c0_16 = arith.constant 0 : index
    %c0_17 = arith.constant 0 : index
    %26 = vector.load %arg8[%c0_16, %c0_17] : memref<1x128xf32, #tpu.memory_space<vmem>>, vector<1x128xf32>
    %27 = vector.broadcast %26 : vector<1x128xf32> to vector<8x128xf32>
    %28 = arith.addf %25, %27 : vector<8x128xf32>
    %cst_18 = arith.constant 0.000000e+00 : f32
    %29 = vector.broadcast %cst_18 : f32 to vector<8x128xf32>
    %30 = arith.maximumf %28, %29 : vector<8x128xf32>
    %31 = arith.truncf %30 : vector<8x128xf32> to vector<8x128xbf16>
    %c0_19 = arith.constant 0 : index
    %c0_20 = arith.constant 0 : index
    %32 = vector.load %arg9[%c0_19, %c0_20] : memref<128x128xbf16, #tpu.memory_space<vmem>>, vector<128x128xbf16>
    %cst_21 = arith.constant dense<0.000000e+00> : vector<8x128xf32>
    %33 = tpu.matmul %31, %32, %cst_21 {dimension_numbers = #tpu.dot_dimension_numbers<[1], [0], [0], [1], [0, 0, 1, 1], [], []>} : vector<8x128xbf16>, vector<128x128xbf16>, vector<8x128xf32> -> vector<8x128xf32>
    %c0_22 = arith.constant 0 : index
    %c0_23 = arith.constant 0 : index
    %34 = vector.load %arg10[%c0_22, %c0_23] : memref<1x128xf32, #tpu.memory_space<vmem>>, vector<1x128xf32>
    %35 = vector.broadcast %34 : vector<1x128xf32> to vector<8x128xf32>
    %36 = arith.addf %33, %35 : vector<8x128xf32>
    %37 = tpu.iota {dimensions = array<i32: 1>} : vector<8x128xi32>
    %c4_i32 = arith.constant 4 : i32
    %38 = vector.broadcast %c4_i32 : i32 to vector<8x128xi32>
    %39 = arith.cmpi slt, %37, %38 : vector<8x128xi32>
    %cst_24 = arith.constant 0.000000e+00 : f32
    %40 = vector.broadcast %cst_24 : f32 to vector<8x128xf32>
    %41 = arith.maximumf %36, %40 : vector<8x128xf32>
    %42 = math.absf %36 : vector<8x128xf32>
    %cst_25 = arith.constant 0.000000e+00 : f32
    %43 = vector.broadcast %cst_25 : f32 to vector<8x128xf32>
    %44 = arith.subf %43, %42 : vector<8x128xf32>
    %45 = math.exp %44 : vector<8x128xf32>
    %46 = math.log1p %45 : vector<8x128xf32>
    %47 = arith.addf %41, %46 : vector<8x128xf32>
    %48 = arith.select %39, %47, %36 : vector<8x128xi1>, vector<8x128xf32>
    %49 = arith.truncf %48 : vector<8x128xf32> to vector<8x128xbf16>
    %c0_26 = arith.constant 0 : index
    %c0_27 = arith.constant 0 : index
    %50 = vector.load %arg11[%c0_26, %c0_27] : memref<8x128xbf16, #tpu.memory_space<vmem>>, vector<8x128xbf16>
    tpu.vector_store %arg11[%c0_26, %c0_27], %49 {strides = array<i32>} : memref<8x128xbf16, #tpu.memory_space<vmem>>, vector<8x128xbf16>,
    return
  }
  func.func @transform_0(%arg0: i32) -> i32 {
    %c0_i32 = arith.constant 0 : i32
    %c0_i32_0 = arith.constant 0 : i32
    return %c0_i32 : i32
  }
  func.func @transform_1(%arg0: i32) -> (i32, i32) {
    %c0_i32 = arith.constant 0 : i32
    %c0_i32_0 = arith.constant 0 : i32
    return %arg0, %c0_i32 : i32, i32
  }
  func.func @transform_2(%arg0: i32) -> (i32, i32) {
    %c0_i32 = arith.constant 0 : i32
    %c0_i32_0 = arith.constant 0 : i32
    %c0_i32_1 = arith.constant 0 : i32
    return %c0_i32, %c0_i32_0 : i32, i32
  }
  func.func @transform_3(%arg0: i32) -> (i32, i32) {
    %c0_i32 = arith.constant 0 : i32
    %c0_i32_0 = arith.constant 0 : i32
    %c0_i32_1 = arith.constant 0 : i32
    return %c0_i32, %c0_i32_0 : i32, i32
  }
  func.func @transform_4(%arg0: i32) -> (i32, i32) {
    %c0_i32 = arith.constant 0 : i32
    %c0_i32_0 = arith.constant 0 : i32
    %c0_i32_1 = arith.constant 0 : i32
    return %c0_i32, %c0_i32_0 : i32, i32
  }
  func.func @transform_5(%arg0: i32) -> (i32, i32) {
    %c0_i32 = arith.constant 0 : i32
    %c0_i32_0 = arith.constant 0 : i32
    %c0_i32_1 = arith.constant 0 : i32
    return %c0_i32, %c0_i32_0 : i32, i32
  }
  func.func @transform_6(%arg0: i32) -> (i32, i32) {
    %c0_i32 = arith.constant 0 : i32
    %c0_i32_0 = arith.constant 0 : i32
    %c0_i32_1 = arith.constant 0 : i32
    return %c0_i32, %c0_i32_0 : i32, i32
  }
  func.func @transform_7(%arg0: i32) -> (i32, i32) {
    %c0_i32 = arith.constant 0 : i32
    %c0_i32_0 = arith.constant 0 : i32
    %c0_i32_1 = arith.constant 0 : i32
    return %c0_i32, %c0_i32_0 : i32, i32
  }
  func.func @transform_8(%arg0: i32) -> (i32, i32) {
    %c0_i32 = arith.constant 0 : i32
    %c0_i32_0 = arith.constant 0 : i32
    %c0_i32_1 = arith.constant 0 : i32
    return %c0_i32, %c0_i32_0 : i32, i32
  }
  func.func @transform_9(%arg0: i32) -> (i32, i32) {
    %c0_i32 = arith.constant 0 : i32
    %c0_i32_0 = arith.constant 0 : i32
    %c0_i32_1 = arith.constant 0 : i32
    return %c0_i32, %c0_i32_0 : i32, i32
  }
  func.func @transform_10(%arg0: i32) -> (i32, i32) {
    %c0_i32 = arith.constant 0 : i32
    %c0_i32_0 = arith.constant 0 : i32
    return %arg0, %c0_i32 : i32, i32
  }
}

</mosaic_0001>

<llo_original>
// kernel: tpu_custom_call.1
$region0: #{tpu_custom_call.1}
  #allocation0 [shape = 'u32[]', space=smem, size = 0x4, offset = 0x4, fixed_abs, tag = 'smem constant byte address 0x4 - core index']
  #allocation1 [shape = 'u32[144,128]{1,0:T(1,128)}', space=vmem, size = 0x12000, scoped, tag = 'internal scratch']
  %s0 = inlined_call_operand.hbm [shape: f32[2], index: 0, kind: input, shape index: {}]
  %s1 = inlined_call_operand.hbm [shape: f32[8,12], index: 1, kind: input, shape index: {}]
  %s2 = inlined_call_operand.hbm [shape: bf16[12,256], index: 2, kind: input, shape index: {}]
  %s3 = inlined_call_operand.vmem [shape: f32[1,256], index: 3, kind: input, shape index: {}]
  %s4 = inlined_call_operand.hbm [shape: bf16[256,128], index: 4, kind: input, shape index: {}]
  %s5 = inlined_call_operand.vmem [shape: f32[1,128], index: 5, kind: input, shape index: {}]
  %s6 = inlined_call_operand.hbm [shape: bf16[128,128], index: 6, kind: input, shape index: {}]
  %s7 = inlined_call_operand.vmem [shape: f32[1,128], index: 7, kind: input, shape index: {}]
  %s8 = inlined_call_operand.hbm [shape: bf16[128,128], index: 8, kind: input, shape index: {}]
  %s9 = inlined_call_operand.vmem [shape: f32[1,128], index: 9, kind: input, shape index: {}]
  %s10 = inlined_call_operand.hbm [shape: bf16[8,128], index: 10, kind: output, shape index: {}]
  %s11 = sld [smem:[#allocation0]]
  $region74: #{tpu_custom_call.1} parent=0
    _
  %s13 = ssub.s32 1, %s11
  %s14 = scalar_select 0, %s13, %s11
  $region1: #{tpu_custom_call.1} parent=0
    #allocation2 [shape = 'u8[512]{0}', space=smem, size = 0x200, scoped, tag = 'input window, operand 0, single buffered']
    #allocation3 [shape = 's32[1]{0}', space=sflag, size = 0x4, scoped, tag = 'scoped memory for tpu_custom_call.1']
    #allocation4 [shape = 's32[1]{0}', space=sflag, size = 0x4, scoped, tag = 'scoped memory for tpu_custom_call.1']
    #allocation5 [shape = 's32[1]{0}', space=sflag, size = 0x4, scoped, tag = 'scoped memory for tpu_custom_call.1']
    #allocation6 [shape = 'u8[4096]{0}', space=vmem, size = 0x1000, scoped, tag = 'input window, operand 1, single buffered']
    #allocation7 [shape = 'u8[8192]{0}', space=vmem, size = 0x2000, scoped, tag = 'input window, operand 2, single buffered']
    #allocation8 [shape = 's32[1]{0}', space=sflag, size = 0x4, scoped, tag = 'scoped memory for tpu_custom_call.1']
    #allocation9 [shape = 'u8[65536]{0}', space=vmem, size = 0x10000, scoped, tag = 'input window, operand 4, single buffered']
    #allocation10 [shape = 'u8[32768]{0}', space=vmem, size = 0x8000, scoped, tag = 'input window, operand 6, single buffered']
    #allocation11 [shape = 's32[1]{0}', space=sflag, size = 0x4, scoped, tag = 'scoped memory for tpu_custom_call.1']
    #allocation12 [shape = 'u8[32768]{0}', space=vmem, size = 0x8000, scoped, tag = 'input window, operand 8, single buffered']
    #allocation13 [shape = 'u8[2048]{0}', space=vmem, size = 0x800, scoped, tag = 'output window, operand 0, single buffered']
    %15 = vsyncpa [#allocation5], 0
    %16 = vsyncpa [#allocation3], 0
    %17 = vsyncpa [#allocation8], 0
    %18 = vsyncpa [#allocation11], 0
    %19 = vsyncpa [#allocation4], 0
    // Predicated region
    $region2: #{tpu_custom_call.1} parent=1 // pred_check
      _
    $region3: #{tpu_custom_call.1} parent=1 // pred_check_branch
      %21 = sbr.rel (0) target = $region5
    $region4: #{tpu_custom_call.1} parent=1 // pred_region
      %s23 = ssub.s32 16, 16
      %24 = vsyncadd [#allocation5], %s23
      %27 = dma.hbm_to_smem %s0, 16, [#allocation2], [#allocation5]
    $region5: #{tpu_custom_call.1} parent=1 // pred_fallthru
      _
    // Predicated region
    $region6: #{tpu_custom_call.1} parent=1 // pred_check
      _
    $region7: #{tpu_custom_call.1} parent=1 // pred_check_branch
      %29 = sbr.rel (0) target = $region9
    $region8: #{tpu_custom_call.1} parent=1 // pred_region
      %s31 = ssub.s32 128, 128
      %32 = vsyncadd [#allocation3], %s31
      %s34 = sshll.u32 [#allocation6], 4
      %s35 = int_to_ptr.vmem [resolvable:$true] %s34
      %37 = dma.hbm_to_vmem [thread:$0]  %s1, 128, %s35, [#allocation3]
    $region9: #{tpu_custom_call.1} parent=1 // pred_fallthru
      _
    // Predicated region
    $region10: #{tpu_custom_call.1} parent=1 // pred_check
      _
    $region11: #{tpu_custom_call.1} parent=1 // pred_check_branch
      %39 = sbr.rel (0) target = $region13
    $region12: #{tpu_custom_call.1} parent=1 // pred_region
      %s41 = ssub.s32 256, 256
      %42 = vsyncadd [#allocation8], %s41
      %s43 = sshll.u32 [#allocation7], 4
      %s44 = int_to_ptr.vmem [resolvable:$true] %s43
      %49 = dma.hbm_to_vmem [thread:$0]  %s2, 256, %s44, [#allocation8], 128, 128, 8
    $region13: #{tpu_custom_call.1} parent=1 // pred_fallthru
      _
    // Predicated region
    $region14: #{tpu_custom_call.1} parent=1 // pred_check
      _
    $region15: #{tpu_custom_call.1} parent=1 // pred_check_branch
      %51 = sbr.rel (0) target = $region17
    $region16: #{tpu_custom_call.1} parent=1 // pred_region
      _
    $region17: #{tpu_custom_call.1} parent=1 // pred_fallthru
      _
    // Predicated region
    $region18: #{tpu_custom_call.1} parent=1 // pred_check
      _
    $region19: #{tpu_custom_call.1} parent=1 // pred_check_branch
      %53 = sbr.rel (0) target = $region21
    $region20: #{tpu_custom_call.1} parent=1 // pred_region
      %s55 = ssub.s32 2048, 2048
      %56 = vsyncadd [#allocation8], %s55
      %s57 = sshll.u32 [#allocation9], 4
      %s58 = int_to_ptr.vmem [resolvable:$true] %s57
      %63 = dma.hbm_to_vmem [thread:$0]  %s4, 2048, %s58, [#allocation8], 64, 64, 4
    $region21: #{tpu_custom_call.1} parent=1 // pred_fallthru
      _
    // Predicated region
    $region22: #{tpu_custom_call.1} parent=1 // pred_check
      _
    $region23: #{tpu_custom_call.1} parent=1 // pred_check_branch
      %65 = sbr.rel (0) target = $region25
    $region24: #{tpu_custom_call.1} parent=1 // pred_region
      _
    $region25: #{tpu_custom_call.1} parent=1 // pred_fallthru
      _
    // Predicated region
    $region26: #{tpu_custom_call.1} parent=1 // pred_check
      _
    $region27: #{tpu_custom_call.1} parent=1 // pred_check_branch
      %67 = sbr.rel (0) target = $region29
    $region28: #{tpu_custom_call.1} parent=1 // pred_region
      %s69 = ssub.s32 1024, 1024
      %70 = vsyncadd [#allocation11], %s69
      %s71 = sshll.u32 [#allocation10], 4
      %s72 = int_to_ptr.vmem [resolvable:$true] %s71
      %77 = dma.hbm_to_vmem [thread:$0]  %s6, 1024, %s72, [#allocation11], 64, 64, 4
    $region29: #{tpu_custom_call.1} parent=1 // pred_fallthru
      _
    // Predicated region
    $region30: #{tpu_custom_call.1} parent=1 // pred_check
      _
    $region31: #{tpu_custom_call.1} parent=1 // pred_check_branch
      %79 = sbr.rel (0) target = $region33
    $region32: #{tpu_custom_call.1} parent=1 // pred_region
      _
    $region33: #{tpu_custom_call.1} parent=1 // pred_fallthru
      _
    // Predicated region
    $region34: #{tpu_custom_call.1} parent=1 // pred_check
      _
    $region35: #{tpu_custom_call.1} parent=1 // pred_check_branch
      %81 = sbr.rel (0) target = $region37
    $region36: #{tpu_custom_call.1} parent=1 // pred_region
      %s83 = ssub.s32 1024, 1024
      %84 = vsyncadd [#allocation11], %s83
      %s85 = sshll.u32 [#allocation12], 4
      %s86 = int_to_ptr.vmem [resolvable:$true] %s85
      %91 = dma.hbm_to_vmem [thread:$0]  %s8, 1024, %s86, [#allocation11], 64, 64, 4
    $region37: #{tpu_custom_call.1} parent=1 // pred_fallthru
      _
    // Predicated region
    $region38: #{tpu_custom_call.1} parent=1 // pred_check
      _
    $region39: #{tpu_custom_call.1} parent=1 // pred_check_branch
      %93 = sbr.rel (0) target = $region41
    $region40: #{tpu_custom_call.1} parent=1 // pred_region
      _
    $region41: #{tpu_custom_call.1} parent=1 // pred_fallthru
      _
    // Predicated region
    $region42: #{tpu_custom_call.1} parent=1 // pred_check
      _
    $region43: #{tpu_custom_call.1} parent=1 // pred_check_branch
      %95 = sbr.rel (0) target = $region45
    $region44: #{tpu_custom_call.1} parent=1 // pred_region
      %96 = dma.done [#allocation5], 16
    $region45: #{tpu_custom_call.1} parent=1 // pred_fallthru
      _
    // Predicated region
    $region46: #{tpu_custom_call.1} parent=1 // pred_check
      _
    $region47: #{tpu_custom_call.1} parent=1 // pred_check_branch
      %98 = sbr.rel (0) target = $region49
    $region48: #{tpu_custom_call.1} parent=1 // pred_region
      %99 = dma.done [#allocation3], 128
    $region49: #{tpu_custom_call.1} parent=1 // pred_fallthru
      _
    // Predicated region
    $region50: #{tpu_custom_call.1} parent=1 // pred_check
      _
    $region51: #{tpu_custom_call.1} parent=1 // pred_check_branch
      %101 = sbr.rel (0) target = $region53
    $region52: #{tpu_custom_call.1} parent=1 // pred_region
      %102 = dma.done [#allocation8], 256
    $region53: #{tpu_custom_call.1} parent=1 // pred_fallthru
      _
    // Predicated region
    $region54: #{tpu_custom_call.1} parent=1 // pred_check
      _
    $region55: #{tpu_custom_call.1} parent=1 // pred_check_branch
      %104 = sbr.rel (0) target = $region57
    $region56: #{tpu_custom_call.1} parent=1 // pred_region
      %105 = dma.done [#allocation8], 2048
    $region57: #{tpu_custom_call.1} parent=1 // pred_fallthru
      _
    // Predicated region
    $region58: #{tpu_custom_call.1} parent=1 // pred_check
      _
    $region59: #{tpu_custom_call.1} parent=1 // pred_check_branch
      %107 = sbr.rel (0) target = $region61
    $region60: #{tpu_custom_call.1} parent=1 // pred_region
      %108 = dma.done [#allocation11], 1024
    $region61: #{tpu_custom_call.1} parent=1 // pred_fallthru
      _
    // Predicated region
    $region62: #{tpu_custom_call.1} parent=1 // pred_check
      _
    $region63: #{tpu_custom_call.1} parent=1 // pred_check_branch
      %110 = sbr.rel (0) target = $region65
    $region64: #{tpu_custom_call.1} parent=1 // pred_region
      %111 = dma.done [#allocation11], 1024
    $region65: #{tpu_custom_call.1} parent=1 // pred_fallthru
      _
    %112 = sfence
    %s114 = sld [smem:[#allocation2]]
    %s115 = sld [smem:[#allocation2 + $0x1]]
    %v116 = vld [vmem:[#allocation6] sm:$0xff]
    %v117 = vstv %s114
    %v118 = vsub.f32 %v116, %v117
    %v119 = vstv %s115
    %v120 = vmul.f32 %v118, %v119
    %v121 = vpack.c.bf16 %v120, %v120
    %v122 = vld [vmem:[#allocation7] sm:$0xff]
    %v123 = vld [vmem:[#allocation7 + $0x8] sm:$0x33]
    %v124 = vld [vmem:[%s3] sm:$0x3]
    %v126 = vlaneseq
    %v127 = vshrl.u32 %v126, 7
    %v128 = vsub.s32 0, %v127
    %v129 = vrot.slane %v124, %v128
    %v130 = vlaneseq
    %v131 = vshrl.u32 %v130, 7
    %v132 = vsub.s32 1, %v131
    %v133 = vrot.slane %v124, %v132
    %v138 = vunpack.c.l.b16 %v122
    %v139 = vunpack.c.h.b16 %v122
    %v140 = vunpack.c.l.b16 %v123
    %v141 = vunpack.c.h.b16 %v123
    %v142 = vpack.c.b16 %v140, %v138
    %v143 = vpack.c.b16 %v141, %v139
    %vm144 = vcmask 97280
    %v146 = vsel %vm144, %v121, 0
    %vm148 = vcmask 1045504
    %v150 = vsel %vm148, %v142, 0
    %v153 = vsel %vm148, %v143, 0
    %155 = vmatprep.subr.bf16.mxu0 %v153
    %156 = vmatpush1.bf16.msra.mxu0 %v150
    %157 = vmatprep.subr.bf16.mxu0 0
    %158 = vmatpush1.bf16.msra.mxu0 0
    %159 = vmatprep.subr.bf16.mxu0 0
    %160 = vmatpush1.bf16.msra.mxu0 0
    %161 = vmatprep.subr.bf16.mxu0 0
    %162 = vmatpush1.bf16.msra.mxu0 0
    %163 = vmatprep.subr.bf16.mxu0 0
    %164 = vmatpush1.bf16.msra.mxu0 0
    %165 = vmatprep.subr.bf16.mxu0 0
    %166 = vmatpush1.bf16.msra.mxu0 0
    %167 = vmatprep.subr.bf16.mxu0 0
    %168 = vmatpush1.bf16.msra.mxu0 0
    %169 = vmatprep.subr.bf16.mxu0 0
    %170 = vmatpush1.bf16.msra.mxu0 0
    %171 = vmatprep.subr.bf16.mxu0 0
    %172 = vmatpush1.bf16.msra.mxu0 0
    %173 = vmatprep.subr.bf16.mxu0 0
    %174 = vmatpush1.bf16.msra.mxu0 0
    %175 = vmatprep.subr.bf16.mxu0 0
    %176 = vmatpush1.bf16.msra.mxu0 0
    %177 = vmatprep.subr.bf16.mxu0 0
    %178 = vmatpush1.bf16.msra.mxu0 0
    %179 = vmatprep.subr.bf16.mxu0 0
    %180 = vmatpush1.bf16.msra.mxu0 0
    %181 = vmatprep.subr.bf16.mxu0 0
    %182 = vmatpush1.bf16.msra.mxu0 0
    %183 = vmatprep.subr.bf16.mxu0 0
    %184 = vmatpush1.bf16.msra.mxu0 0
    %185 = vmatprep.subr.bf16.mxu0 0
    %186 = vmatpush1.bf16.msra.mxu0 0
    %187 = vmatprep.mubr.bf16.mxu0 0
    %188 = vmatmul.mubr.bf16.gmra.mrb[0].mxu0 %v146
    %v189 = vpop.f32.mrb[0].mxu0
    %v190 = vadd.f32 %v129, %v189
    %v191 = vpop.f32.mrb[0].mxu0
    %v192 = vadd.f32 %v133, %v191
    %v193 = vpop.f32.mrb[0].mxu0
    %v194 = vpop.f32.mrb[0].mxu0
    %195 = vdwg.mxu0
    %v196 = vmax.f32 %v190, 0.0
    %v197 = vmax.f32 %v192, 0.0
    %v198 = vpack.c.bf16 %v196, %v196
    %v199 = vpack.c.bf16 %v197, %v197
    %v200 = vld [vmem:[#allocation9] sm:$0xf]
    %v201 = vld [vmem:[#allocation9 + $0x4] sm:$0xf]
    %v202 = vld [vmem:[#allocation9 + $0x8] sm:$0xf]
    %v203 = vld [vmem:[#allocation9 + $0xc] sm:$0xf]
    %v204 = vld [vmem:[#allocation9 + $0x10] sm:$0xf]
    %v205 = vld [vmem:[#allocation9 + $0x14] sm:$0xf]
    %v206 = vld [vmem:[#allocation9 + $0x18] sm:$0xf]
    %v207 = vld [vmem:[#allocation9 + $0x1c] sm:$0xf]
    %v208 = vld [vmem:[#allocation9 + $0x20] sm:$0xf]
    %v209 = vld [vmem:[#allocation9 + $0x24] sm:$0xf]
    %v210 = vld [vmem:[#allocation9 + $0x28] sm:$0xf]
    %v211 = vld [vmem:[#allocation9 + $0x2c] sm:$0xf]
    %v212 = vld [vmem:[#allocation9 + $0x30] sm:$0xf]
    %v213 = vld [vmem:[#allocation9 + $0x34] sm:$0xf]
    %v214 = vld [vmem:[#allocation9 + $0x38] sm:$0xf]
    %v215 = vld [vmem:[#allocation9 + $0x3c] sm:$0xf]
    %v216 = vld [vmem:[#allocation9 + $0x40] sm:$0xf]
    %v217 = vld [vmem:[#allocation9 + $0x44] sm:$0xf]
    %v218 = vld [vmem:[#allocation9 + $0x48] sm:$0xf]
    %v219 = vld [vmem:[#allocation9 + $0x4c] sm:$0xf]
    %v220 = vld [vmem:[#allocation9 + $0x50] sm:$0xf]
    %v221 = vld [vmem:[#allocation9 + $0x54] sm:$0xf]
    %v222 = vld [vmem:[#allocation9 + $0x58] sm:$0xf]
    %v223 = vld [vmem:[#allocation9 + $0x5c] sm:$0xf]
    %v224 = vld [vmem:[#allocation9 + $0x60] sm:$0xf]
    %v225 = vld [vmem:[#allocation9 + $0x64] sm:$0xf]
    %v226 = vld [vmem:[#allocation9 + $0x68] sm:$0xf]
    %v227 = vld [vmem:[#allocation9 + $0x6c] sm:$0xf]
    %v228 = vld [vmem:[#allocation9 + $0x70] sm:$0xf]
    %v229 = vld [vmem:[#allocation9 + $0x74] sm:$0xf]
    %v230 = vld [vmem:[#allocation9 + $0x78] sm:$0xf]
    %v231 = vld [vmem:[#allocation9 + $0x7c] sm:$0xf]
    %v232 = vld [vmem:[%s5] sm:$0x1]
    %v234 = vlaneseq
    %v235 = vshrl.u32 %v234, 7
    %v236 = vsub.s32 0, %v235
    %v237 = vrot.slane %v232, %v236
    %v271 = vunpack.c.l.b16 %v200
    %v272 = vunpack.c.l.b16 %v201
    %v273 = vunpack.c.l.b16 %v202
    %v274 = vunpack.c.l.b16 %v203
    %v275 = vunpack.c.l.b16 %v204
    %v276 = vunpack.c.l.b16 %v205
    %v277 = vunpack.c.l.b16 %v206
    %v278 = vunpack.c.l.b16 %v207
    %v279 = vunpack.c.l.b16 %v208
    %v280 = vunpack.c.l.b16 %v209
    %v281 = vunpack.c.l.b16 %v210
    %v282 = vunpack.c.l.b16 %v211
    %v283 = vunpack.c.l.b16 %v212
    %v284 = vunpack.c.l.b16 %v213
    %v285 = vunpack.c.l.b16 %v214
    %v286 = vunpack.c.l.b16 %v215
    %v287 = vunpack.c.l.b16 %v216
    %v288 = vunpack.c.l.b16 %v217
    %v289 = vunpack.c.l.b16 %v218
    %v290 = vunpack.c.l.b16 %v219
    %v291 = vunpack.c.l.b16 %v220
    %v292 = vunpack.c.l.b16 %v221
    %v293 = vunpack.c.l.b16 %v222
    %v294 = vunpack.c.l.b16 %v223
    %v295 = vunpack.c.l.b16 %v224
    %v296 = vunpack.c.l.b16 %v225
    %v297 = vunpack.c.l.b16 %v226
    %v298 = vunpack.c.l.b16 %v227
    %v299 = vunpack.c.l.b16 %v228
    %v300 = vunpack.c.l.b16 %v229
    %v301 = vunpack.c.l.b16 %v230
    %v302 = vunpack.c.l.b16 %v231
    %v303 = vpack.c.b16 %v272, %v271
    %v304 = vpack.c.b16 %v274, %v273
    %v305 = vpack.c.b16 %v276, %v275
    %v306 = vpack.c.b16 %v278, %v277
    %v307 = vpack.c.b16 %v280, %v279
    %v308 = vpack.c.b16 %v282, %v281
    %v309 = vpack.c.b16 %v284, %v283
    %v310 = vpack.c.b16 %v286, %v285
    %v311 = vpack.c.b16 %v288, %v287
    %v312 = vpack.c.b16 %v290, %v289
    %v313 = vpack.c.b16 %v292, %v291
    %v314 = vpack.c.b16 %v294, %v293
    %v315 = vpack.c.b16 %v296, %v295
    %v316 = vpack.c.b16 %v298, %v297
    %v317 = vpack.c.b16 %v300, %v299
    %v318 = vpack.c.b16 %v302, %v301
    %335 = vmatprep.subr.bf16.mxu0 0
    %336 = vmatpush1.bf16.msra.mxu0 %v303
    %337 = vmatprep.subr.bf16.mxu0 0
    %338 = vmatpush1.bf16.msra.mxu0 %v304
    %339 = vmatprep.subr.bf16.mxu0 0
    %340 = vmatpush1.bf16.msra.mxu0 %v305
    %341 = vmatprep.subr.bf16.mxu0 0
    %342 = vmatpush1.bf16.msra.mxu0 %v306
    %343 = vmatprep.subr.bf16.mxu0 0
    %344 = vmatpush1.bf16.msra.mxu0 %v307
    %345 = vmatprep.subr.bf16.mxu0 0
    %346 = vmatpush1.bf16.msra.mxu0 %v308
    %347 = vmatprep.subr.bf16.mxu0 0
    %348 = vmatpush1.bf16.msra.mxu0 %v309
    %349 = vmatprep.subr.bf16.mxu0 0
    %350 = vmatpush1.bf16.msra.mxu0 %v310
    %351 = vmatprep.subr.bf16.mxu0 0
    %352 = vmatpush1.bf16.msra.mxu0 %v311
    %353 = vmatprep.subr.bf16.mxu0 0
    %354 = vmatpush1.bf16.msra.mxu0 %v312
    %355 = vmatprep.subr.bf16.mxu0 0
    %356 = vmatpush1.bf16.msra.mxu0 %v313
    %357 = vmatprep.subr.bf16.mxu0 0
    %358 = vmatpush1.bf16.msra.mxu0 %v314
    %359 = vmatprep.subr.bf16.mxu0 0
    %360 = vmatpush1.bf16.msra.mxu0 %v315
    %361 = vmatprep.subr.bf16.mxu0 0
    %362 = vmatpush1.bf16.msra.mxu0 %v316
    %363 = vmatprep.subr.bf16.mxu0 0
    %364 = vmatpush1.bf16.msra.mxu0 %v317
    %365 = vmatprep.subr.bf16.mxu0 0
    %366 = vmatpush1.bf16.msra.mxu0 %v318
    %367 = vmatprep.mubr.bf16.mxu0 %v199
    %368 = vmatmul.mubr.bf16.gmra.mrb[0].mxu0 %v198
    %v369 = vpop.f32.mrb[0].mxu0
    %v370 = vadd.f32 %v237, %v369
    %v371 = vpop.f32.mrb[0].mxu0
    %v372 = vpop.f32.mrb[0].mxu0
    %v373 = vpop.f32.mrb[0].mxu0
    %374 = vdwg.mxu0
    %v375 = vmax.f32 %v370, 0.0
    %v376 = vpack.c.bf16 %v375, %v375
    %v377 = vld [vmem:[#allocation10] sm:$0xf]
    %v378 = vld [vmem:[#allocation10 + $0x4] sm:$0xf]
    %v379 = vld [vmem:[#allocation10 + $0x8] sm:$0xf]
    %v380 = vld [vmem:[#allocation10 + $0xc] sm:$0xf]
    %v381 = vld [vmem:[#allocation10 + $0x10] sm:$0xf]
    %v382 = vld [vmem:[#allocation10 + $0x14] sm:$0xf]
    %v383 = vld [vmem:[#allocation10 + $0x18] sm:$0xf]
    %v384 = vld [vmem:[#allocation10 + $0x1c] sm:$0xf]
    %v385 = vld [vmem:[#allocation10 + $0x20] sm:$0xf]
    %v386 = vld [vmem:[#allocation10 + $0x24] sm:$0xf]
    %v387 = vld [vmem:[#allocation10 + $0x28] sm:$0xf]
    %v388 = vld [vmem:[#allocation10 + $0x2c] sm:$0xf]
    %v389 = vld [vmem:[#allocation10 + $0x30] sm:$0xf]
    %v390 = vld [vmem:[#allocation10 + $0x34] sm:$0xf]
    %v391 = vld [vmem:[#allocation10 + $0x38] sm:$0xf]
    %v392 = vld [vmem:[#allocation10 + $0x3c] sm:$0xf]
    %v393 = vld [vmem:[%s7] sm:$0x1]
    %v395 = vlaneseq
    %v396 = vshrl.u32 %v395, 7
    %v397 = vsub.s32 0, %v396
    %v398 = vrot.slane %v393, %v397
    %v416 = vunpack.c.l.b16 %v377
    %v417 = vunpack.c.l.b16 %v378
    %v418 = vunpack.c.l.b16 %v379
    %v419 = vunpack.c.l.b16 %v380
    %v420 = vunpack.c.l.b16 %v381
    %v421 = vunpack.c.l.b16 %v382
    %v422 = vunpack.c.l.b16 %v383
    %v423 = vunpack.c.l.b16 %v384
    %v424 = vunpack.c.l.b16 %v385
    %v425 = vunpack.c.l.b16 %v386
    %v426 = vunpack.c.l.b16 %v387
    %v427 = vunpack.c.l.b16 %v388
    %v428 = vunpack.c.l.b16 %v389
    %v429 = vunpack.c.l.b16 %v390
    %v430 = vunpack.c.l.b16 %v391
    %v431 = vunpack.c.l.b16 %v392
    %v432 = vpack.c.b16 %v417, %v416
    %v433 = vpack.c.b16 %v419, %v418
    %v434 = vpack.c.b16 %v421, %v420
    %v435 = vpack.c.b16 %v423, %v422
    %v436 = vpack.c.b16 %v425, %v424
    %v437 = vpack.c.b16 %v427, %v426
    %v438 = vpack.c.b16 %v429, %v428
    %v439 = vpack.c.b16 %v431, %v430
    %448 = vmatprep.subr.bf16.mxu0 0
    %449 = vmatpush1.bf16.msra.mxu0 %v432
    %450 = vmatprep.subr.bf16.mxu0 0
    %451 = vmatpush1.bf16.msra.mxu0 %v433
    %452 = vmatprep.subr.bf16.mxu0 0
    %453 = vmatpush1.bf16.msra.mxu0 %v434
    %454 = vmatprep.subr.bf16.mxu0 0
    %455 = vmatpush1.bf16.msra.mxu0 %v435
    %456 = vmatprep.subr.bf16.mxu0 0
    %457 = vmatpush1.bf16.msra.mxu0 %v436
    %458 = vmatprep.subr.bf16.mxu0 0
    %459 = vmatpush1.bf16.msra.mxu0 %v437
    %460 = vmatprep.subr.bf16.mxu0 0
    %461 = vmatpush1.bf16.msra.mxu0 %v438
    %462 = vmatprep.subr.bf16.mxu0 0
    %463 = vmatpush1.bf16.msra.mxu0 %v439
    %464 = vmatprep.subr.bf16.mxu0 0
    %465 = vmatpush1.bf16.msra.mxu0 0
    %466 = vmatprep.subr.bf16.mxu0 0
    %467 = vmatpush1.bf16.msra.mxu0 0
    %468 = vmatprep.subr.bf16.mxu0 0
    %469 = vmatpush1.bf16.msra.mxu0 0
    %470 = vmatprep.subr.bf16.mxu0 0
    %471 = vmatpush1.bf16.msra.mxu0 0
    %472 = vmatprep.subr.bf16.mxu0 0
    %473 = vmatpush1.bf16.msra.mxu0 0
    %474 = vmatprep.subr.bf16.mxu0 0
    %475 = vmatpush1.bf16.msra.mxu0 0
    %476 = vmatprep.subr.bf16.mxu0 0
    %477 = vmatpush1.bf16.msra.mxu0 0
    %478 = vmatprep.subr.bf16.mxu0 0
    %479 = vmatpush1.bf16.msra.mxu0 0
    %480 = vmatprep.mubr.bf16.mxu0 0
    %481 = vmatmul.mubr.bf16.gmra.mrb[0].mxu0 %v376
    %v482 = vpop.f32.mrb[0].mxu0
    %v483 = vadd.f32 %v398, %v482
    %v484 = vpop.f32.mrb[0].mxu0
    %v485 = vpop.f32.mrb[0].mxu0
    %v486 = vpop.f32.mrb[0].mxu0
    %487 = vdwg.mxu0
    %v488 = vmax.f32 %v483, 0.0
    %v489 = vpack.c.bf16 %v488, %v488
    %v490 = vld [vmem:[#allocation12] sm:$0xf]
    %v491 = vld [vmem:[#allocation12 + $0x4] sm:$0xf]
    %v492 = vld [vmem:[#allocation12 + $0x8] sm:$0xf]
    %v493 = vld [vmem:[#allocation12 + $0xc] sm:$0xf]
    %v494 = vld [vmem:[#allocation12 + $0x10] sm:$0xf]
    %v495 = vld [vmem:[#allocation12 + $0x14] sm:$0xf]
    %v496 = vld [vmem:[#allocation12 + $0x18] sm:$0xf]
    %v497 = vld [vmem:[#allocation12 + $0x1c] sm:$0xf]
    %v498 = vld [vmem:[#allocation12 + $0x20] sm:$0xf]
    %v499 = vld [vmem:[#allocation12 + $0x24] sm:$0xf]
    %v500 = vld [vmem:[#allocation12 + $0x28] sm:$0xf]
    %v501 = vld [vmem:[#allocation12 + $0x2c] sm:$0xf]
    %v502 = vld [vmem:[#allocation12 + $0x30] sm:$0xf]
    %v503 = vld [vmem:[#allocation12 + $0x34] sm:$0xf]
    %v504 = vld [vmem:[#allocation12 + $0x38] sm:$0xf]
    %v505 = vld [vmem:[#allocation12 + $0x3c] sm:$0xf]
    %v506 = vld [vmem:[%s9] sm:$0x1]
    %v508 = vlaneseq
    %v509 = vshrl.u32 %v508, 7
    %v510 = vsub.s32 0, %v509
    %v511 = vrot.slane %v506, %v510
    %v529 = vunpack.c.l.b16 %v490
    %v530 = vunpack.c.l.b16 %v491
    %v531 = vunpack.c.l.b16 %v492
    %v532 = vunpack.c.l.b16 %v493
    %v533 = vunpack.c.l.b16 %v494
    %v534 = vunpack.c.l.b16 %v495
    %v535 = vunpack.c.l.b16 %v496
    %v536 = vunpack.c.l.b16 %v497
    %v537 = vunpack.c.l.b16 %v498
    %v538 = vunpack.c.l.b16 %v499
    %v539 = vunpack.c.l.b16 %v500
    %v540 = vunpack.c.l.b16 %v501
    %v541 = vunpack.c.l.b16 %v502
    %v542 = vunpack.c.l.b16 %v503
    %v543 = vunpack.c.l.b16 %v504
    %v544 = vunpack.c.l.b16 %v505
    %v545 = vpack.c.b16 %v530, %v529
    %v546 = vpack.c.b16 %v532, %v531
    %v547 = vpack.c.b16 %v534, %v533
    %v548 = vpack.c.b16 %v536, %v535
    %v549 = vpack.c.b16 %v538, %v537
    %v550 = vpack.c.b16 %v540, %v539
    %v551 = vpack.c.b16 %v542, %v541
    %v552 = vpack.c.b16 %v544, %v543
    %561 = vmatprep.subr.bf16.mxu0 0
    %562 = vmatpush1.bf16.msra.mxu0 %v545
    %563 = vmatprep.subr.bf16.mxu0 0
    %564 = vmatpush1.bf16.msra.mxu0 %v546
    %565 = vmatprep.subr.bf16.mxu0 0
    %566 = vmatpush1.bf16.msra.mxu0 %v547
    %567 = vmatprep.subr.bf16.mxu0 0
    %568 = vmatpush1.bf16.msra.mxu0 %v548
    %569 = vmatprep.subr.bf16.mxu0 0
    %570 = vmatpush1.bf16.msra.mxu0 %v549
    %571 = vmatprep.subr.bf16.mxu0 0
    %572 = vmatpush1.bf16.msra.mxu0 %v550
    %573 = vmatprep.subr.bf16.mxu0 0
    %574 = vmatpush1.bf16.msra.mxu0 %v551
    %575 = vmatprep.subr.bf16.mxu0 0
    %576 = vmatpush1.bf16.msra.mxu0 %v552
    %577 = vmatprep.subr.bf16.mxu0 0
    %578 = vmatpush1.bf16.msra.mxu0 0
    %579 = vmatprep.subr.bf16.mxu0 0
    %580 = vmatpush1.bf16.msra.mxu0 0
    %581 = vmatprep.subr.bf16.mxu0 0
    %582 = vmatpush1.bf16.msra.mxu0 0
    %583 = vmatprep.subr.bf16.mxu0 0
    %584 = vmatpush1.bf16.msra.mxu0 0
    %585 = vmatprep.subr.bf16.mxu0 0
    %586 = vmatpush1.bf16.msra.mxu0 0
    %587 = vmatprep.subr.bf16.mxu0 0
    %588 = vmatpush1.bf16.msra.mxu0 0
    %589 = vmatprep.subr.bf16.mxu0 0
    %590 = vmatpush1.bf16.msra.mxu0 0
    %591 = vmatprep.subr.bf16.mxu0 0
    %592 = vmatpush1.bf16.msra.mxu0 0
    %593 = vmatprep.mubr.bf16.mxu0 0
    %594 = vmatmul.mubr.bf16.gmra.mrb[0].mxu0 %v489
    %v595 = vpop.f32.mrb[0].mxu0
    %v596 = vadd.f32 %v511, %v595
    %v597 = vpop.f32.mrb[0].mxu0
    %v598 = vpop.f32.mrb[0].mxu0
    %v599 = vpop.f32.mrb[0].mxu0
    %600 = vdwg.mxu0
    %v601 = vlaneseq
    %v602 = vand.u32 %v601, 127
    %vm603 = vcmp.lt.s32.totalorder %v602, 4
    %v604 = vmax.f32 %v596, 0.0
    %v605 = vand.u32 2147483647, %v596
    %v606 = vsub.f32 0.0, %v605
    %v607 = vmul.f32 %v606, 1.442695
    %v608 = vpow.pop %v607
    %v609 = vadd.f32 %v608, 1.0
    %v610 = vlog2.pop %v609
    %v611 = vmul.f32 %v610, 0.6931472
    %v612 = vmul.f32 -0.5, %v608
    %v613 = vadd.f32 %v612, 1.0
    %v614 = vmul.f32 %v613, %v608
    %v615 = vand.u32 2147483647, %v608
    %vm616 = vcmp.lt.f32.partialorder %v615, 0.0004427343
    %v617 = vsel %vm616, %v614, %v611
    %v618 = vadd.f32 %v604, %v617
    %v619 = vsel %vm603, %v618, %v596
    %v620 = vpack.c.bf16 %v619, %v619
    %621 = vst [vmem:[#allocation13] sm:$0xf] %v620
    // Predicated region
    $region66: #{tpu_custom_call.1} parent=1 // pred_check
      _
    $region67: #{tpu_custom_call.1} parent=1 // pred_check_branch
      %623 = sbr.rel (0) target = $region69
    $region68: #{tpu_custom_call.1} parent=1 // pred_region
      %s625 = ssub.s32 64, 64
      %626 = vsyncadd [#allocation4], %s625
      %s628 = sshll.u32 [#allocation13], 4
      %s629 = int_to_ptr.vmem [resolvable:$true] %s628
      %631 = dma.vmem_to_hbm [thread:$0]  %s629, 64, %s10, [#allocation4]
    $region69: #{tpu_custom_call.1} parent=1 // pred_fallthru
      _
    // Predicated region
    $region70: #{tpu_custom_call.1} parent=1 // pred_check
      _
    $region71: #{tpu_custom_call.1} parent=1 // pred_check_branch
      %633 = sbr.rel (0) target = $region73
    $region72: #{tpu_custom_call.1} parent=1 // pred_region
      %634 = dma.done [#allocation4], 64
    $region73: #{tpu_custom_call.1} parent=1 // pred_fallthru
      _
    %635 = vsyncpa [#allocation3], 1
    %636 = vsyncpa [#allocation8], 1
    %637 = vsyncpa [#allocation11], 1
    %638 = vsyncpa [#allocation4], 1
    %639 = vsyncpa [#allocation5], 1

</llo_original>
